<compile_context>
chip_gen: v5e
topology: v5e:2x2
jax: 0.10.0
libtpu: 0.0.40
codegen_flags: <defaults>
</compile_context>

<pallas_src>
import functools

import numpy as np
import jax
import jax.numpy as jnp
from jax.experimental import pallas as pl
from jax.experimental.pallas import tpu as pltpu


# ----------------------------------------------------------------------------
# Glue (plain JAX): helpers used by the PyTorch module outside the hot loop.
# ----------------------------------------------------------------------------
def build_distance_weight_matrix(N, sigma):
    idx = jnp.arange(N, dtype=jnp.float32)
    dist = jnp.abs(idx[:, None] - idx[None, :])
    return jnp.exp(-(dist ** 2) / (2.0 * sigma * sigma))


def multi_scale_diffusion(z, scales):
    # TODO(synk): multi_scale_diffusion is not defined in the provided module;
    # implemented here as the average over `scales` of powers of a row-softmax
    # cosine-similarity transition matrix (a standard diffusion formulation).
    zn = z / jnp.maximum(jnp.linalg.norm(z, axis=-1, keepdims=True), 1e-12)
    sim = jnp.einsum("bnd,bmd->bnm", zn, zn)
    P = jax.nn.softmax(sim, axis=-1)
    assoc = jnp.zeros_like(P)
    for s in scales:
        Ps = P
        for _ in range(int(s) - 1):
            Ps = jnp.einsum("bij,bjk->bik", Ps, P)
        assoc = assoc + Ps
    return assoc / float(len(scales))


# ----------------------------------------------------------------------------
# Pallas kernel: extended SimCLR loss for a block of batch elements.
# ----------------------------------------------------------------------------
def _loss_kernel(z1_ref, z2_ref, scores_ref, loss_ref, *, temperature, top_k, eps):
    f32 = jnp.float32
    z1 = z1_ref[...].astype(f32)                       # (Bb, N, D)
    z2 = z2_ref[...].astype(f32)                       # (Bb, N, D)
    Bb, N, D = z1.shape
    two_n = 2 * N

    def l2norm(z):
        n2 = jnp.sum(z * z, axis=-1, keepdims=True)
        return z * jax.lax.rsqrt(jnp.maximum(n2, 1e-24))

    z1n = l2norm(z1)
    z2n = l2norm(z2)
    zc = jnp.concatenate([z1n, z2n], axis=1)           # (Bb, 2N, D)

    inv_t = f32(1.0 / temperature)
    # Single fused batched matmul for the whole 2N x 2N similarity block.
    sim = jnp.einsum("bnd,bmd->bnm", zc, zc,
                     preferred_element_type=jnp.float32)   # (Bb, 2N, 2N)
    # Stabilized exp: rows are unit-norm so sim <= 1 and exp((sim-1)/T) <= 1;
    # the num/denom ratio is invariant to the common exp(-1/T) factor.
    e = jnp.exp((sim - 1.0) * inv_t)

    # Strong positives (diag of the cross block) via one row-wise VPU dot,
    # identical for anchors i and i+N.
    strong = jnp.exp((jnp.sum(z1n * z2n, axis=-1) - 1.0) * inv_t)   # (Bb, N)

    # Denominator: full row sum minus the (exactly unit) self term.
    denom = jnp.sum(e, axis=-1) - 1.0                               # (Bb, 2N)

    # 2-D iotas, computed once and reused everywhere (never materialized 3-D).
    row = jax.lax.broadcasted_iota(jnp.int32, (two_n, N), 0)
    col = jax.lax.broadcasted_iota(jnp.int32, (two_n, N), 1)
    not_self = jnp.logical_and(col != row, col != row - N)          # (2N, N)

    # Precomputed positive-pair scores (alpha*pos_w + (1-alpha)*assoc),
    # already stacked for both anchor halves: (Bb, 2N, N).
    scores = scores_ref[...].astype(f32)

    # Iterative top-k (lowest index wins ties) over all 2N anchors at once.
    work = scores
    mask = jnp.zeros(scores.shape, dtype=jnp.bool_)
    neg_inf = f32(-jnp.inf)
    for _ in range(top_k):
        rowmax = jnp.max(work, axis=-1, keepdims=True)
        is_max = work == rowmax
        idx = jnp.min(jnp.where(is_max, col[None], N), axis=-1, keepdims=True)
        sel = col[None] == idx
        mask = jnp.logical_or(mask, sel)
        work = jnp.where(sel, neg_inf, work)

    # Keep only top-k weights, drop the strong positive (col == anchor mod N).
    w_cross = jnp.where(jnp.logical_and(mask, not_self[None]), scores, 0.0)

    # Numerator per anchor half against the matching cross blocks of e
    # (no (Bb, 2N, 2N) scatter, reductions are N-wide instead of 2N-wide).
    e_top = e[:, :N, N:]                                # anchors 0..N-1  vs view2 cols
    e_bot = e[:, N:, :N]                                # anchors N..2N-1 vs view1 cols
    numer_top = strong + jnp.sum(w_cross[:, :N, :] * e_top, axis=-1)   # (Bb, N)
    numer_bot = strong + jnp.sum(w_cross[:, N:, :] * e_bot, axis=-1)   # (Bb, N)
    numer = jnp.concatenate([numer_top, numer_bot], axis=-1)           # (Bb, 2N)

    eps_f = f32(eps)
    inv_denom = pl.reciprocal(denom + eps_f, approx=True)              # EUP slot
    loss = -jnp.log(numer * inv_denom + eps_f)                         # (Bb, 2N)

    loss_ref[0] = loss


# ----------------------------------------------------------------------------
# Generation-aware sizing helpers.
# ----------------------------------------------------------------------------
def _tpu_vmem_and_cores():
    """Returns (per-core VMEM bytes, #TensorCores sharing the grid)."""
    vmem = 64 * 1024 * 1024          # conservative fallback (v7x per-TC VMEM)
    try:
        info = pltpu.get_tpu_info()
        v = int(getattr(info, "vmem_capacity_bytes", 0) or 0)
        if v > 0:
            vmem = v
    except Exception:
        pass
    # Heuristic: 64 MiB per-TC VMEM => v7x-class chip with 2 TCs per chip.
    n_tc = 2 if vmem <= 64 * 1024 * 1024 else 1
    return vmem, n_tc


def _pick_batch_block(B, N, D, itemsize, budget_bytes, n_tc):
    two_n = 2 * N
    # Double-buffered input DMAs (z1, z2, scores) per batch element.
    per_elem = 2 * ((2 * N * D) * itemsize + (two_n * N) * 4)
    # Rough f32 in-kernel intermediates per batch element
    # (zc, sim/e, scores copy, work, mask, w_cross, e slices, numer halves).
    per_elem += (2 * two_n * D + 2 * two_n * two_n + 7 * two_n * N) * 4
    max_b = max(1, budget_bytes // max(per_elem, 1))
    divisors = [d for d in range(1, B + 1) if B % d == 0 and d <= max_b]
    if not divisors:
        return 1
    if n_tc > 1:
        # Prefer an even split across the TensorCores of the chip.
        even = [d for d in divisors if (B // d) % n_tc == 0]
        if even:
            return max(even)
    # Single TC: largest block wins (fewer grid steps, less pipeline overhead).
    return max(divisors)


def simclr_extended_loss_pallas(z1, z2, assoc1, assoc2,
                                *, temperature, alpha, top_k, sigma):
    B, N, D = z1.shape
    two_n = 2 * N

    # Fold the Gaussian distance weights + alpha blend into a single precomputed
    # score stream (fuses into the diffusion epilogue in XLA; removes per-grid-
    # step EUP exp / VPU FMA from the kernel, same DMA traffic as the raw assoc).
    pos_w = build_distance_weight_matrix(N, sigma)                  # (N, N)
    a = jnp.float32(alpha)
    scores_top = a * pos_w[None] + (1.0 - a) * assoc2.astype(jnp.float32)  # anchors 0..N-1
    scores_bot = a * pos_w[None] + (1.0 - a) * assoc1.astype(jnp.float32)  # anchors N..2N-1
    scores = jnp.concatenate([scores_top, scores_bot], axis=1)      # (B, 2N, N)

    itemsize = jnp.dtype(z1.dtype).itemsize
    vmem_bytes, n_tc = _tpu_vmem_and_cores()
    vmem_limit = max(32 * 1024 * 1024, int(vmem_bytes * 0.85))
    block_budget = int(vmem_limit * 0.70)     # headroom for outputs + compiler scratch
    bblk = _pick_batch_block(B, N, D, itemsize, block_budget, n_tc)
    grid_b = B // bblk

    kernel = functools.partial(
        _loss_kernel,
        temperature=float(temperature),
        top_k=int(max(1, min(int(top_k), N))),
        eps=1e-9,
    )
    losses = pl.pallas_call(
        kernel,
        out_shape=jax.ShapeDtypeStruct((grid_b, bblk, two_n), jnp.float32),
        grid=(grid_b,),
        in_specs=[
            pl.BlockSpec((bblk, N, D), lambda g: (g, 0, 0)),        # z1
            pl.BlockSpec((bblk, N, D), lambda g: (g, 0, 0)),        # z2
            pl.BlockSpec((bblk, two_n, N), lambda g: (g, 0, 0)),    # scores
        ],
        out_specs=pl.BlockSpec((1, bblk, two_n), lambda g: (g, 0, 0)),
        compiler_params=pltpu.CompilerParams(
            dimension_semantics=("parallel",),
            vmem_limit_bytes=vmem_limit,
        ),
    )(z1, z2, scores)
    return losses.reshape(B, two_n)   # per-anchor losses


def seq_extended_contrastive_loss_forward(outputs, cfg, temperature=0.07):
    z1 = outputs["proj_z1"]
    z2 = outputs["proj_z2"]
    assoc1 = multi_scale_diffusion(z1, cfg["scales"])
    assoc2 = multi_scale_diffusion(z2, cfg["scales"])
    losses = simclr_extended_loss_pallas(
        z1, z2, assoc1, assoc2,
        temperature=temperature,
        alpha=cfg["alpha"],
        top_k=cfg["extend_top_k"],
        sigma=cfg["sigma"],
    )
    loss = jnp.mean(losses)
    return {"loss_contrastive": cfg["loss_weights"]["loss_cl_weight"] * loss}


# ----------------------------------------------------------------------------
# Pure numpy reference mirroring the PyTorch loops (for a correctness check).
# ----------------------------------------------------------------------------
def _reference_loss(z1, z2, assoc1, assoc2, pos_w, temperature, alpha, top_k):
    z1 = np.asarray(z1, np.float64)
    z2 = np.asarray(z2, np.float64)
    assoc1 = np.asarray(assoc1, np.float64)
    assoc2 = np.asarray(assoc2, np.float64)
    pos_w = np.asarray(pos_w, np.float64)
    B, N, _ = z1.shape
    losses = []
    for b in range(B):
        zc = np.concatenate([z1[b], z2[b]], axis=0)
        zc = zc / np.maximum(np.linalg.norm(zc, axis=1, keepdims=True), 1e-12)
        es = np.exp(zc @ zc.T / temperature)
        for i in range(2 * N):
            if i < N:
                strong = i + N
                score = alpha * pos_w[i] + (1 - alpha) * assoc2[b, i]
                half = [int(p) + N for p in np.argsort(-score, kind="stable")[:top_k]]
            else:
                ii = i - N
                strong = ii
                score = alpha * pos_w[ii] + (1 - alpha) * assoc1[b, ii]
                half = [int(p) for p in np.argsort(-score, kind="stable")[:top_k]]
            denom = es[i].sum() - es[i, i]
            num = es[i, strong]
            for hp in half:
                if hp == strong:
                    continue
                p_idx = hp - N if i < N else hp
                num += score[p_idx] * es[i, hp]
            losses.append(-np.log(num / (denom + 1e-9) + 1e-9))
    return float(np.mean(losses))


if __name__ == "__main__":
    cfg = {
        "loss_weights": {"loss_cl_weight": 1.0},
        "extend_top_k": 3,
        "alpha": 0.5,
        "scales": (1, 2),
        "local_k": 3,   # unused in forward
        "sigma": 2.0,
    }
    B, N, D = 4, 8, 32
    key = jax.random.PRNGKey(0)
    k1, k2 = jax.random.split(key)
    proj_z1 = jax.random.normal(k1, (B, N, D), dtype=jnp.float32)
    proj_z2 = jax.random.normal(k2, (B, N, D), dtype=jnp.float32)
    outputs = {"proj_z1": proj_z1, "proj_z2": proj_z2}

    result = seq_extended_contrastive_loss_forward(outputs, cfg, temperature=0.07)
    loss = jax.block_until_ready(result["loss_contrastive"])

    # Cross-check against a direct numpy transcription of the PyTorch loops.
    assoc1 = multi_scale_diffusion(proj_z1, cfg["scales"])
    assoc2 = multi_scale_diffusion(proj_z2, cfg["scales"])
    pos_w = build_distance_weight_matrix(N, cfg["sigma"])
    ref = cfg["loss_weights"]["loss_cl_weight"] * _reference_loss(
        proj_z1, proj_z2, assoc1, assoc2, pos_w,
        temperature=0.07, alpha=cfg["alpha"], top_k=cfg["extend_top_k"])
    assert abs(float(loss) - ref) <= 5e-3 * max(1.0, abs(ref)), (float(loss), ref)

    print("KERNEL_OK")
</pallas_src>

<mosaic_0001>
module attributes {stable_mosaic.version = 11 : i64} {
  func.func @_loss_kernel(%arg0: i32, %arg1: memref<2x8x32xf32, #tpu.memory_space<vmem>>, %arg2: memref<2x8x32xf32, #tpu.memory_space<vmem>>, %arg3: memref<2x16x8xf32, #tpu.memory_space<vmem>>, %arg4: memref<1x2x16xf32, #tpu.memory_space<vmem>>) attributes {dimension_semantics = [#tpu.dimension_semantics<parallel>], iteration_bounds = array<i64: 2>, scalar_prefetch = 0 : i64, scratch_operands = 0 : i64, tpu.core_type = #tpu.core_type<tc>, window_params = [{transform_indices = @transform_0, window_bounds = array<i64: 2, 8, 32>}, {transform_indices = @transform_1, window_bounds = array<i64: 2, 8, 32>}, {transform_indices = @transform_2, window_bounds = array<i64: 2, 16, 8>}, {transform_indices = @transform_3, window_bounds = array<i64: 1, 2, 16>}]} {
    %c0 = arith.constant 0 : index
    %c0_0 = arith.constant 0 : index
    %c0_1 = arith.constant 0 : index
    %0 = vector.load %arg1[%c0, %c0_0, %c0_1] : memref<2x8x32xf32, #tpu.memory_space<vmem>>, vector<2x8x32xf32>
    %c0_2 = arith.constant 0 : index
    %c0_3 = arith.constant 0 : index
    %c0_4 = arith.constant 0 : index
    %1 = vector.load %arg2[%c0_2, %c0_3, %c0_4] : memref<2x8x32xf32, #tpu.memory_space<vmem>>, vector<2x8x32xf32>
    %2 = arith.mulf %0, %0 : vector<2x8x32xf32>
    %cst = arith.constant dense<0.000000e+00> : vector<2x8xf32>
    %3 = vector.multi_reduction <add>, %2, %cst [2] : vector<2x8x32xf32> to vector<2x8xf32>
    %4 = vector.shape_cast %3 : vector<2x8xf32> to vector<2x8x1xf32>
    %cst_5 = arith.constant 1.000000e-24 : f32
    %5 = vector.broadcast %cst_5 : f32 to vector<2x8x1xf32>
    %6 = arith.maximumf %4, %5 : vector<2x8x1xf32>
    %7 = math.rsqrt %6 : vector<2x8x1xf32>
    %8 = vector.broadcast %7 : vector<2x8x1xf32> to vector<2x8x32xf32>
    %9 = arith.mulf %0, %8 : vector<2x8x32xf32>
    %10 = arith.mulf %1, %1 : vector<2x8x32xf32>
    %cst_6 = arith.constant dense<0.000000e+00> : vector<2x8xf32>
    %11 = vector.multi_reduction <add>, %10, %cst_6 [2] : vector<2x8x32xf32> to vector<2x8xf32>
    %12 = vector.shape_cast %11 : vector<2x8xf32> to vector<2x8x1xf32>
    %cst_7 = arith.constant 1.000000e-24 : f32
    %13 = vector.broadcast %cst_7 : f32 to vector<2x8x1xf32>
    %14 = arith.maximumf %12, %13 : vector<2x8x1xf32>
    %15 = math.rsqrt %14 : vector<2x8x1xf32>
    %16 = vector.broadcast %15 : vector<2x8x1xf32> to vector<2x8x32xf32>
    %17 = arith.mulf %1, %16 : vector<2x8x32xf32>
    %18 = tpu.concatenate %9, %17 in 1 : vector<2x8x32xf32>, vector<2x8x32xf32> -> vector<2x16x32xf32>
    "tpu.trace_start"() <{level = 10 : i32, message = "bnd,bmd->bnm"}> : () -> ()
    %cst_8 = arith.constant dense<0.000000e+00> : vector<2x16x16xf32>
    %19 = tpu.matmul %18, %18, %cst_8 {dimension_numbers = #tpu.dot_dimension_numbers<[2], [2], [1], [1], [0, 0, 0, 1, 1, 1], [0], [0]>} : vector<2x16x32xf32>, vector<2x16x32xf32>, vector<2x16x16xf32> -> vector<2x16x16xf32>
    "tpu.trace_stop"() : () -> ()
    %cst_9 = arith.constant 1.000000e+00 : f32
    %20 = vector.broadcast %cst_9 : f32 to vector<2x16x16xf32>
    %21 = arith.subf %19, %20 : vector<2x16x16xf32>
    %cst_10 = arith.constant 14.2857141 : f32
    %22 = vector.broadcast %cst_10 : f32 to vector<2x16x16xf32>
    %23 = arith.mulf %21, %22 : vector<2x16x16xf32>
    %24 = math.exp %23 : vector<2x16x16xf32>
    %25 = arith.mulf %9, %17 : vector<2x8x32xf32>
    %cst_11 = arith.constant dense<0.000000e+00> : vector<2x8xf32>
    %26 = vector.multi_reduction <add>, %25, %cst_11 [2] : vector<2x8x32xf32> to vector<2x8xf32>
    %cst_12 = arith.constant 1.000000e+00 : f32
    %27 = vector.broadcast %cst_12 : f32 to vector<2x8xf32>
    %28 = arith.subf %26, %27 : vector<2x8xf32>
    %cst_13 = arith.constant 14.2857141 : f32
    %29 = vector.broadcast %cst_13 : f32 to vector<2x8xf32>
    %30 = arith.mulf %28, %29 : vector<2x8xf32>
    %31 = math.exp %30 : vector<2x8xf32>
    %cst_14 = arith.constant dense<0.000000e+00> : vector<2x16xf32>
    %32 = vector.multi_reduction <add>, %24, %cst_14 [2] : vector<2x16x16xf32> to vector<2x16xf32>
    %cst_15 = arith.constant 1.000000e+00 : f32
    %33 = vector.broadcast %cst_15 : f32 to vector<2x16xf32>
    %34 = arith.subf %32, %33 : vector<2x16xf32>
    %35 = tpu.iota {dimensions = array<i32: 0>} : vector<16x8xi32>
    %36 = tpu.iota {dimensions = array<i32: 1>} : vector<16x8xi32>
    %37 = arith.cmpi ne, %36, %35 : vector<16x8xi32>
    %c8_i32 = arith.constant 8 : i32
    %38 = vector.broadcast %c8_i32 : i32 to vector<16x8xi32>
    %39 = arith.subi %35, %38 : vector<16x8xi32>
    %40 = arith.cmpi ne, %36, %39 : vector<16x8xi32>
    %41 = arith.andi %37, %40 : vector<16x8xi1>
    %c0_16 = arith.constant 0 : index
    %c0_17 = arith.constant 0 : index
    %c0_18 = arith.constant 0 : index
    %42 = vector.load %arg3[%c0_16, %c0_17, %c0_18] : memref<2x16x8xf32, #tpu.memory_space<vmem>>, vector<2x16x8xf32>
    %false = arith.constant false
    %43 = vector.broadcast %false : i1 to vector<2x16x8xi1>
    %cst_19 = arith.constant dense<0xFF800000> : vector<2x16xf32>
    %44 = vector.multi_reduction <maximumf>, %42, %cst_19 [2] : vector<2x16x8xf32> to vector<2x16xf32>
    %45 = vector.shape_cast %44 : vector<2x16xf32> to vector<2x16x1xf32>
    %46 = vector.broadcast %45 : vector<2x16x1xf32> to vector<2x16x8xf32>
    %47 = arith.cmpf oeq, %42, %46 : vector<2x16x8xf32>
    %48 = vector.shape_cast %36 : vector<16x8xi32> to vector<1x16x8xi32>
    %c8_i32_20 = arith.constant 8 : i32
    %49 = vector.shape_cast %48 : vector<1x16x8xi32> to vector<1x16x8xi32>
    %50 = vector.broadcast %49 : vector<1x16x8xi32> to vector<2x16x8xi32>
    %51 = vector.broadcast %c8_i32_20 : i32 to vector<2x16x8xi32>
    %52 = arith.select %47, %50, %51 : vector<2x16x8xi1>, vector<2x16x8xi32>
    %cst_21 = arith.constant dense<2147483647> : vector<2x16xi32>
    %53 = vector.multi_reduction <minsi>, %52, %cst_21 [2] : vector<2x16x8xi32> to vector<2x16xi32>
    %54 = vector.shape_cast %53 : vector<2x16xi32> to vector<2x16x1xi32>
    %55 = vector.shape_cast %36 : vector<16x8xi32> to vector<1x16x8xi32>
    %56 = vector.broadcast %55 : vector<1x16x8xi32> to vector<2x16x8xi32>
    %57 = vector.broadcast %54 : vector<2x16x1xi32> to vector<2x16x8xi32>
    %58 = arith.cmpi eq, %56, %57 : vector<2x16x8xi32>
    %59 = arith.ori %43, %58 : vector<2x16x8xi1>
    %cst_22 = arith.constant 0xFF800000 : f32
    %60 = vector.broadcast %cst_22 : f32 to vector<2x16x8xf32>
    %61 = arith.select %58, %60, %42 : vector<2x16x8xi1>, vector<2x16x8xf32>
    %cst_23 = arith.constant dense<0xFF800000> : vector<2x16xf32>
    %62 = vector.multi_reduction <maximumf>, %61, %cst_23 [2] : vector<2x16x8xf32> to vector<2x16xf32>
    %63 = vector.shape_cast %62 : vector<2x16xf32> to vector<2x16x1xf32>
    %64 = vector.broadcast %63 : vector<2x16x1xf32> to vector<2x16x8xf32>
    %65 = arith.cmpf oeq, %61, %64 : vector<2x16x8xf32>
    %66 = vector.shape_cast %36 : vector<16x8xi32> to vector<1x16x8xi32>
    %c8_i32_24 = arith.constant 8 : i32
    %67 = vector.shape_cast %66 : vector<1x16x8xi32> to vector<1x16x8xi32>
    %68 = vector.broadcast %67 : vector<1x16x8xi32> to vector<2x16x8xi32>
    %69 = vector.broadcast %c8_i32_24 : i32 to vector<2x16x8xi32>
    %70 = arith.select %65, %68, %69 : vector<2x16x8xi1>, vector<2x16x8xi32>
    %cst_25 = arith.constant dense<2147483647> : vector<2x16xi32>
    %71 = vector.multi_reduction <minsi>, %70, %cst_25 [2] : vector<2x16x8xi32> to vector<2x16xi32>
    %72 = vector.shape_cast %71 : vector<2x16xi32> to vector<2x16x1xi32>
    %73 = vector.shape_cast %36 : vector<16x8xi32> to vector<1x16x8xi32>
    %74 = vector.broadcast %73 : vector<1x16x8xi32> to vector<2x16x8xi32>
    %75 = vector.broadcast %72 : vector<2x16x1xi32> to vector<2x16x8xi32>
    %76 = arith.cmpi eq, %74, %75 : vector<2x16x8xi32>
    %77 = arith.ori %59, %76 : vector<2x16x8xi1>
    %cst_26 = arith.constant 0xFF800000 : f32
    %78 = vector.broadcast %cst_26 : f32 to vector<2x16x8xf32>
    %79 = arith.select %76, %78, %61 : vector<2x16x8xi1>, vector<2x16x8xf32>
    %cst_27 = arith.constant dense<0xFF800000> : vector<2x16xf32>
    %80 = vector.multi_reduction <maximumf>, %79, %cst_27 [2] : vector<2x16x8xf32> to vector<2x16xf32>
    %81 = vector.shape_cast %80 : vector<2x16xf32> to vector<2x16x1xf32>
    %82 = vector.broadcast %81 : vector<2x16x1xf32> to vector<2x16x8xf32>
    %83 = arith.cmpf oeq, %79, %82 : vector<2x16x8xf32>
    %84 = vector.shape_cast %36 : vector<16x8xi32> to vector<1x16x8xi32>
    %c8_i32_28 = arith.constant 8 : i32
    %85 = vector.shape_cast %84 : vector<1x16x8xi32> to vector<1x16x8xi32>
    %86 = vector.broadcast %85 : vector<1x16x8xi32> to vector<2x16x8xi32>
    %87 = vector.broadcast %c8_i32_28 : i32 to vector<2x16x8xi32>
    %88 = arith.select %83, %86, %87 : vector<2x16x8xi1>, vector<2x16x8xi32>
    %cst_29 = arith.constant dense<2147483647> : vector<2x16xi32>
    %89 = vector.multi_reduction <minsi>, %88, %cst_29 [2] : vector<2x16x8xi32> to vector<2x16xi32>
    %90 = vector.shape_cast %89 : vector<2x16xi32> to vector<2x16x1xi32>
    %91 = vector.shape_cast %36 : vector<16x8xi32> to vector<1x16x8xi32>
    %92 = vector.broadcast %91 : vector<1x16x8xi32> to vector<2x16x8xi32>
    %93 = vector.broadcast %90 : vector<2x16x1xi32> to vector<2x16x8xi32>
    %94 = arith.cmpi eq, %92, %93 : vector<2x16x8xi32>
    %95 = arith.ori %77, %94 : vector<2x16x8xi1>
    %96 = vector.shape_cast %41 : vector<16x8xi1> to vector<1x16x8xi1>
    %97 = vector.broadcast %96 : vector<1x16x8xi1> to vector<2x16x8xi1>
    %98 = arith.andi %95, %97 : vector<2x16x8xi1>
    %cst_30 = arith.constant 0.000000e+00 : f32
    %99 = vector.broadcast %cst_30 : f32 to vector<2x16x8xf32>
    %100 = arith.select %98, %42, %99 : vector<2x16x8xi1>, vector<2x16x8xf32>
    %101 = vector.extract_strided_slice %24 {offsets = [0, 0, 8], sizes = [2, 8, 8], strides = [1, 1, 1]} : vector<2x16x16xf32> to vector<2x8x8xf32>
    %102 = vector.extract_strided_slice %24 {offsets = [0, 8, 0], sizes = [2, 8, 8], strides = [1, 1, 1]} : vector<2x16x16xf32> to vector<2x8x8xf32>
    %103 = vector.extract_strided_slice %100 {offsets = [0, 0, 0], sizes = [2, 8, 8], strides = [1, 1, 1]} : vector<2x16x8xf32> to vector<2x8x8xf32>
    %104 = arith.mulf %103, %101 : vector<2x8x8xf32>
    %cst_31 = arith.constant dense<0.000000e+00> : vector<2x8xf32>
    %105 = vector.multi_reduction <add>, %104, %cst_31 [2] : vector<2x8x8xf32> to vector<2x8xf32>
    %106 = arith.addf %31, %105 : vector<2x8xf32>
    %107 = vector.extract_strided_slice %100 {offsets = [0, 8, 0], sizes = [2, 8, 8], strides = [1, 1, 1]} : vector<2x16x8xf32> to vector<2x8x8xf32>
    %108 = arith.mulf %107, %102 : vector<2x8x8xf32>
    %cst_32 = arith.constant dense<0.000000e+00> : vector<2x8xf32>
    %109 = vector.multi_reduction <add>, %108, %cst_32 [2] : vector<2x8x8xf32> to vector<2x8xf32>
    %110 = arith.addf %31, %109 : vector<2x8xf32>
    %111 = tpu.concatenate %106, %110 in 1 : vector<2x8xf32>, vector<2x8xf32> -> vector<2x16xf32>
    %cst_33 = arith.constant 9.99999971E-10 : f32
    %112 = vector.broadcast %cst_33 : f32 to vector<2x16xf32>
    %113 = arith.addf %34, %112 : vector<2x16xf32>
    %114 = tpu.reciprocal %113 {approx = true} : vector<2x16xf32> -> vector<2x16xf32>
    %115 = arith.mulf %111, %114 : vector<2x16xf32>
    %cst_34 = arith.constant 9.99999971E-10 : f32
    %116 = vector.broadcast %cst_34 : f32 to vector<2x16xf32>
    %117 = arith.addf %115, %116 : vector<2x16xf32>
    %118 = math.log %117 : vector<2x16xf32>
    %cst_35 = arith.constant 0.000000e+00 : f32
    %119 = vector.broadcast %cst_35 : f32 to vector<2x16xf32>
    %120 = arith.subf %119, %118 : vector<2x16xf32>
    %c0_36 = arith.constant 0 : index
    %c0_37 = arith.constant 0 : index
    %c0_38 = arith.constant 0 : index
    %121 = vector.load %arg4[%c0_36, %c0_37, %c0_38] : memref<1x2x16xf32, #tpu.memory_space<vmem>>, vector<1x2x16xf32>
    %122 = vector.shape_cast %121 : vector<1x2x16xf32> to vector<2x16xf32>
    %123 = vector.shape_cast %120 : vector<2x16xf32> to vector<1x2x16xf32>
    tpu.vector_store %arg4[%c0_36, %c0_37, %c0_38], %123 {strides = array<i32>} : memref<1x2x16xf32, #tpu.memory_space<vmem>>, vector<1x2x16xf32>,
    return
  }
  func.func @transform_0(%arg0: i32) -> (i32, i32, i32) {
    %c0_i32 = arith.constant 0 : i32
    %c0_i32_0 = arith.constant 0 : i32
    %c0_i32_1 = arith.constant 0 : i32
    return %arg0, %c0_i32, %c0_i32_0 : i32, i32, i32
  }
  func.func @transform_1(%arg0: i32) -> (i32, i32, i32) {
    %c0_i32 = arith.constant 0 : i32
    %c0_i32_0 = arith.constant 0 : i32
    %c0_i32_1 = arith.constant 0 : i32
    return %arg0, %c0_i32, %c0_i32_0 : i32, i32, i32
  }
  func.func @transform_2(%arg0: i32) -> (i32, i32, i32) {
    %c0_i32 = arith.constant 0 : i32
    %c0_i32_0 = arith.constant 0 : i32
    %c0_i32_1 = arith.constant 0 : i32
    return %arg0, %c0_i32, %c0_i32_0 : i32, i32, i32
  }
  func.func @transform_3(%arg0: i32) -> (i32, i32, i32) {
    %c0_i32 = arith.constant 0 : i32
    %c0_i32_0 = arith.constant 0 : i32
    %c0_i32_1 = arith.constant 0 : i32
    return %arg0, %c0_i32, %c0_i32_0 : i32, i32, i32
  }
}

</mosaic_0001>

<llo_original>
// kernel: tpu_custom_call.1
$region0: #{tpu_custom_call.1}
  #allocation0 [shape = 'u32[]', space=smem, size = 0x4, offset = 0x4, fixed_abs, tag = 'smem constant byte address 0x4 - core index']
  #allocation1 [shape = 'u32[72,128]{1,0:T(1,128)}', space=vmem, size = 0x9000, scoped, tag = 'internal scratch']
  %s0 = inlined_call_operand.vmem [shape: f32[4,8,32], index: 0, kind: input, shape index: {}]
  %s1 = inlined_call_operand.vmem [shape: f32[4,8,32], index: 1, kind: input, shape index: {}]
  %s2 = inlined_call_operand.vmem [shape: f32[4,16,8], index: 2, kind: input, shape index: {}]
  %s3 = inlined_call_operand.hbm [shape: f32[2,2,16], index: 3, kind: output, shape index: {}]
  %s4 = sld [smem:[#allocation0]]
  $region45: #{tpu_custom_call.1} parent=0
    _
  %s6 = ssub.s32 1, %s4
  %s7 = scalar_select 0, %s6, %s4
  $region1: #{tpu_custom_call.1} parent=0
    #allocation2 [shape = 'u8[2048]{0}', space=vmem, size = 0x800, scoped, tag = 'output window, operand 0']
    #allocation3 [shape = 's32[2]{0}', space=sflag, size = 0x8, scoped, tag = 'scoped memory for tpu_custom_call.1']
    %8 = vsyncpa [#allocation3], 0
    %s9 = scalar_lea.sflag [#allocation3], 1
    %10 = vsyncpa %s9, 0
    loop: start=0, step=1, limit=4
    $region2: #{tpu_custom_call.1} parent=1 // loop_pre_header
      _
    $region3: #{tpu_custom_call.1} parent=1 // loop_header
      %s12 = sphi 0, %s16
      %p13 = scmp.ge.s32.totalorder %s12, 4
      %s22 = sphi 0, %s24
      %s25 = sphi 0, %s22
      %s26 = sphi 0, %s25
      %s42 = sphi 0, %s26
      %s48 = sphi 0, %s50
      %s51 = sphi 0, %s48
      %s52 = sphi 0, %s51
      %s68 = sphi 0, %s52
      %s74 = sphi 0, %s76
      %s77 = sphi 0, %s74
      %s78 = sphi 0, %s77
      %s94 = sphi 0, %s78
      %s100 = sphi 0, %s102
      %s103 = sphi 0, %s100
      %s104 = sphi 0, %s103
      %s120 = sphi 0, %s104
    $region4: #{tpu_custom_call.1} parent=1 // loop_header_branch
      %15 = sbr.rel (%p13) target = $region8
    $region5: #{tpu_custom_call.1} parent=1 // loop_body
      %s17 = ssub.s32 %s12, 1
      %s18 = ssub.s32 %s12, 2
      %s19 = sadd.s32 %s12, 1
      %s20 = ssub.s32 %s12, %s19
      %p21 = scmp.eq.s32.totalorder %s20, 0
      %s23 = sadd.s32 %s22, 1
      %s24 = scalar_select %p21, %s22, %s23
      %p27 = pneg %p21
      %p28 = scmp.eq.s32.totalorder %s12, 1
      %p29 = por %p27, %p28
      %p30 = scmp.ne.s32.totalorder %s22, %s25
      %p31 = scmp.eq.s32.totalorder %s12, 0
      %p32 = por %p30, %p31
      %p33 = scmp.ne.s32.totalorder %s22, %s25
      %p34 = scmp.eq.s32.totalorder %s17, 1
      %p35 = por %p33, %p34
      %p36 = scmp.ne.s32.totalorder %s25, %s26
      %p37 = scmp.eq.s32.totalorder %s17, 0
      %p38 = por %p36, %p37
      %p39 = scmp.ne.s32.totalorder %s25, %s26
      %p40 = scmp.eq.s32.totalorder %s18, 1
      %p41 = por %p39, %p40
      %p43 = scmp.ne.s32.totalorder %s26, %s42
      %p44 = scmp.eq.s32.totalorder %s18, 0
      %p45 = por %p43, %p44
      %s46 = ssub.s32 %s12, %s19
      %p47 = scmp.eq.s32.totalorder %s46, 0
      %s49 = sadd.s32 %s48, 1
      %s50 = scalar_select %p47, %s48, %s49
      %p53 = pneg %p47
      %p54 = scmp.eq.s32.totalorder %s12, 1
      %p55 = por %p53, %p54
      %p56 = scmp.ne.s32.totalorder %s48, %s51
      %p57 = scmp.eq.s32.totalorder %s12, 0
      %p58 = por %p56, %p57
      %p59 = scmp.ne.s32.totalorder %s48, %s51
      %p60 = scmp.eq.s32.totalorder %s17, 1
      %p61 = por %p59, %p60
      %p62 = scmp.ne.s32.totalorder %s51, %s52
      %p63 = scmp.eq.s32.totalorder %s17, 0
      %p64 = por %p62, %p63
      %p65 = scmp.ne.s32.totalorder %s51, %s52
      %p66 = scmp.eq.s32.totalorder %s18, 1
      %p67 = por %p65, %p66
      %p69 = scmp.ne.s32.totalorder %s52, %s68
      %p70 = scmp.eq.s32.totalorder %s18, 0
      %p71 = por %p69, %p70
      %s72 = ssub.s32 %s12, %s19
      %p73 = scmp.eq.s32.totalorder %s72, 0
      %s75 = sadd.s32 %s74, 1
      %s76 = scalar_select %p73, %s74, %s75
      %p79 = pneg %p73
      %p80 = scmp.eq.s32.totalorder %s12, 1
      %p81 = por %p79, %p80
      %p82 = scmp.ne.s32.totalorder %s74, %s77
      %p83 = scmp.eq.s32.totalorder %s12, 0
      %p84 = por %p82, %p83
      %p85 = scmp.ne.s32.totalorder %s74, %s77
      %p86 = scmp.eq.s32.totalorder %s17, 1
      %p87 = por %p85, %p86
      %p88 = scmp.ne.s32.totalorder %s77, %s78
      %p89 = scmp.eq.s32.totalorder %s17, 0
      %p90 = por %p88, %p89
      %p91 = scmp.ne.s32.totalorder %s77, %s78
      %p92 = scmp.eq.s32.totalorder %s18, 1
      %p93 = por %p91, %p92
      %p95 = scmp.ne.s32.totalorder %s78, %s94
      %p96 = scmp.eq.s32.totalorder %s18, 0
      %p97 = por %p95, %p96
      %s98 = ssub.s32 %s12, %s19
      %p99 = scmp.eq.s32.totalorder %s98, 0
      %s101 = sadd.s32 %s100, 1
      %s102 = scalar_select %p99, %s100, %s101
      %p105 = pneg %p99
      %p106 = scmp.eq.s32.totalorder %s12, 1
      %p107 = por %p105, %p106
      %p108 = scmp.ne.s32.totalorder %s100, %s103
      %p109 = scmp.eq.s32.totalorder %s12, 0
      %p110 = por %p108, %p109
      %p111 = scmp.ne.s32.totalorder %s100, %s103
      %p112 = scmp.eq.s32.totalorder %s17, 1
      %p113 = por %p111, %p112
      %p114 = scmp.ne.s32.totalorder %s103, %s104
      %p115 = scmp.eq.s32.totalorder %s17, 0
      %p116 = por %p114, %p115
      %p117 = scmp.ne.s32.totalorder %s103, %s104
      %p118 = scmp.eq.s32.totalorder %s18, 1
      %p119 = por %p117, %p118
      %p121 = scmp.ne.s32.totalorder %s104, %s120
      %p122 = scmp.eq.s32.totalorder %s18, 0
      %p123 = por %p121, %p122
      %p124 = scmp.le.s32.totalorder 1, %s12
      %p125 = scmp.lt.s32.totalorder %s12, 3
      %p126 = pnand %p124, %p125
      %p127 = pneg %p126
      // Predicated region
      $region9: #{tpu_custom_call.1} parent=5 // pred_check
        _
      $region10: #{tpu_custom_call.1} parent=5 // pred_check_branch
        %129 = sbr.rel (%p126) target = $region12
      $region11: #{tpu_custom_call.1} parent=5 // pred_region
        %s130 = ssub.s32 %s12, 1
      $region12: #{tpu_custom_call.1} parent=5 // pred_fallthru
        _
      %p131 = scmp.lt.s32.totalorder %s12, 2
      // Predicated region
      $region13: #{tpu_custom_call.1} parent=5 // pred_check
        %p132 = pneg %p131
      $region14: #{tpu_custom_call.1} parent=5 // pred_check_branch
        %134 = sbr.rel (%p132) target = $region16
      $region15: #{tpu_custom_call.1} parent=5 // pred_region
        // Predicated region
        $region17: #{tpu_custom_call.1} parent=15 // pred_check
          %p135 = pneg %p32
        $region18: #{tpu_custom_call.1} parent=15 // pred_check_branch
          %137 = sbr.rel (%p135) target = $region20
        $region19: #{tpu_custom_call.1} parent=15 // pred_region
          %s138 = smul.u32 2, %s12
          %p139 = scmp.lt.s32.totalorder %s138, 3
          %s140 = scalar_select %p139, %s138, 3
          %s141 = smul.addr %s140, 8
          %s142 = scalar_lea.vmem %s0, %s141
          %s143 = smul.u32 2, %s12
        $region20: #{tpu_custom_call.1} parent=15 // pred_fallthru
          _
        // Predicated region
        $region21: #{tpu_custom_call.1} parent=15 // pred_check
          %p144 = pneg %p58
        $region22: #{tpu_custom_call.1} parent=15 // pred_check_branch
          %146 = sbr.rel (%p144) target = $region24
        $region23: #{tpu_custom_call.1} parent=15 // pred_region
          %s147 = smul.u32 2, %s12
          %p148 = scmp.lt.s32.totalorder %s147, 3
          %s149 = scalar_select %p148, %s147, 3
          %s150 = smul.addr %s149, 8
          %s151 = scalar_lea.vmem %s1, %s150
          %s152 = smul.u32 2, %s12
        $region24: #{tpu_custom_call.1} parent=15 // pred_fallthru
          _
        // Predicated region
        $region25: #{tpu_custom_call.1} parent=15 // pred_check
          %p153 = pneg %p84
        $region26: #{tpu_custom_call.1} parent=15 // pred_check_branch
          %155 = sbr.rel (%p153) target = $region28
        $region27: #{tpu_custom_call.1} parent=15 // pred_region
          %s156 = smul.u32 2, %s12
          %p157 = scmp.lt.s32.totalorder %s156, 3
          %s158 = scalar_select %p157, %s156, 3
          %s159 = smul.addr %s158, 2
          %s160 = smul.addr %s159, 8
          %s161 = scalar_lea.vmem %s2, %s160
          %s162 = smul.u32 2, %s12
        $region28: #{tpu_custom_call.1} parent=15 // pred_fallthru
          _
      $region16: #{tpu_custom_call.1} parent=5 // pred_fallthru
        _
      %p163 = scmp.le.s32.totalorder 1, %s12
      %p164 = scmp.lt.s32.totalorder %s12, 3
      %p165 = pnand %p163, %p164
      %p166 = pneg %p165
      // Predicated region
      $region29: #{tpu_custom_call.1} parent=5 // pred_check
        _
      $region30: #{tpu_custom_call.1} parent=5 // pred_check_branch
        %168 = sbr.rel (%p165) target = $region32
      $region31: #{tpu_custom_call.1} parent=5 // pred_region
        %s169 = ssub.s32 %s12, 1
        %s170 = smul.u32 2, %s17
        %p171 = scmp.lt.s32.totalorder %s170, 3
        %s172 = scalar_select %p171, %s170, 3
        %s173 = smul.addr %s172, 8
        %s174 = scalar_lea.vmem %s0, %s173
        %p175 = pneg %p38
        %p176 = pneg %p35
        %s177 = smul.u32 2, %s17
        %p178 = scmp.lt.s32.totalorder %s177, 3
        %s179 = scalar_select %p178, %s177, 3
        %s180 = smul.addr %s179, 8
        %s181 = scalar_lea.vmem %s1, %s180
        %p182 = pneg %p64
        %p183 = pneg %p61
        %s184 = smul.u32 2, %s17
        %p185 = scmp.lt.s32.totalorder %s184, 3
        %s186 = scalar_select %p185, %s184, 3
        %s187 = smul.addr %s186, 2
        %s188 = smul.addr %s187, 8
        %s189 = scalar_lea.vmem %s2, %s188
        %p190 = pneg %p90
        %p191 = pneg %p87
        %p192 = pneg %p116
        %p193 = pneg %p113
        %s194 = sand.u32 %s103, 1
        %s195 = scalar_lea.sflag [#allocation3], %s194
        %s196 = sand.u32 %s103, 1
        %s197 = smul.addr %s196, 2
        %s198 = scalar_lea.vmem [#allocation2], %s197
        %s199 = smul.u32 2, %s17
        %p200 = scmp.lt.s32.totalorder %s199, 3
        %s201 = scalar_select %p200, %s199, 3
        %s202 = smul.addr %s201, 8
        %s203 = scalar_lea.vmem %s0, %s202
        %s204 = smul.u32 2, %s17
        %s205 = smul.u32 2, %s17
        %p206 = scmp.lt.s32.totalorder %s205, 3
        %s207 = scalar_select %p206, %s205, 3
        %s208 = smul.addr %s207, 8
        %s209 = scalar_lea.vmem %s1, %s208
        %s210 = smul.u32 2, %s17
        %s211 = smul.u32 2, %s17
        %p212 = scmp.lt.s32.totalorder %s211, 3
        %s213 = scalar_select %p212, %s211, 3
        %s214 = smul.addr %s213, 2
        %s215 = smul.addr %s214, 8
        %s216 = scalar_lea.vmem %s2, %s215
        %s217 = smul.u32 2, %s17
        %v218 = vld [vmem:[%s203] sm:$0xff]
        %v219 = vld [vmem:[%s203 + $0x8] sm:$0xff]
        %v220 = vld [vmem:[%s209] sm:$0xff]
        %v221 = vld [vmem:[%s209 + $0x8] sm:$0xff]
        %v222 = vmul.f32 %v218, %v218
        %v223 = vmul.f32 %v219, %v219
        %vm224 = vcmask 261120
        %v225 = vsel %vm224, %v222, 0.0
        %226 = vadd.xlane.f32.xlu0 %v225
        %v227 = vpop.xlane.xlu0 %226
        %v228 = vsel %vm224, %v223, 0.0
        %229 = vadd.xlane.f32.xlu0 %v228
        %v230 = vpop.xlane.xlu0 %229
        %v231 = vmax.f32 %v227, 1e-24
        %v232 = vmax.f32 %v230, 1e-24
        %v233 = vrsqrt.pop %v231
        %v234 = vmul.f32 %v233, %v231
        %v235 = vmul.f32 %v234, %v233
        %v236 = vmul.f32 0.5, %v235
        %v237 = vsub.f32 1.5, %v236
        %v238 = vmul.f32 %v233, %v237
        %vm239 = vweird.f32 %v231
        %vm240 = vweird.f32 %v233
        %vm241 = vmor %vm239, %vm240
        %v242 = vsel %vm241, %v233, %v238
        %v243 = vrsqrt.pop %v232
        %v244 = vmul.f32 %v243, %v232
        %v245 = vmul.f32 %v244, %v243
        %v246 = vmul.f32 0.5, %v245
        %v247 = vsub.f32 1.5, %v246
        %v248 = vmul.f32 %v243, %v247
        %vm249 = vweird.f32 %v232
        %vm250 = vweird.f32 %v243
        %vm251 = vmor %vm249, %vm250
        %v252 = vsel %vm251, %v243, %v248
        %v253 = vmul.f32 %v218, %v242
        %v254 = vmul.f32 %v219, %v252
        %v255 = vmul.f32 %v220, %v220
        %v256 = vmul.f32 %v221, %v221
        %v257 = vsel %vm224, %v255, 0.0
        %258 = vadd.xlane.f32.xlu0 %v257
        %v259 = vpop.xlane.xlu0 %258
        %v260 = vsel %vm224, %v256, 0.0
        %261 = vadd.xlane.f32.xlu0 %v260
        %v262 = vpop.xlane.xlu0 %261
        %v263 = vmax.f32 %v259, 1e-24
        %v264 = vmax.f32 %v262, 1e-24
        %v265 = vrsqrt.pop %v263
        %v266 = vmul.f32 %v265, %v263
        %v267 = vmul.f32 %v266, %v265
        %v268 = vmul.f32 0.5, %v267
        %v269 = vsub.f32 1.5, %v268
        %v270 = vmul.f32 %v265, %v269
        %vm271 = vweird.f32 %v263
        %vm272 = vweird.f32 %v265
        %vm273 = vmor %vm271, %vm272
        %v274 = vsel %vm273, %v265, %v270
        %v275 = vrsqrt.pop %v264
        %v276 = vmul.f32 %v275, %v264
        %v277 = vmul.f32 %v276, %v275
        %v278 = vmul.f32 0.5, %v277
        %v279 = vsub.f32 1.5, %v278
        %v280 = vmul.f32 %v275, %v279
        %vm281 = vweird.f32 %v264
        %vm282 = vweird.f32 %v275
        %vm283 = vmor %vm281, %vm282
        %v284 = vsel %vm283, %v275, %v280
        %v285 = vmul.f32 %v220, %v274
        %v286 = vmul.f32 %v221, %v284
        %v288 = vsel %vm224, %v253, 0
        %v291 = vsel %vm224, %v285, 0
        %293 = vmatpush.xpose.msra.mxu0 0.0
        %294 = vmatpush.xpose.msra.mxu0 0.0
        %295 = vmatpush.xpose.msra.mxu0 0.0
        %296 = vmatpush.xpose.msra.mxu0 0.0
        %297 = vmatpush.xpose.msra.mxu0 0.0
        %298 = vmatpush.xpose.msra.mxu0 0.0
        %299 = vmatpush.xpose.msra.mxu0 0.0
        %300 = vmatpush.xpose.msra.mxu0 0.0
        %301 = vmatpush.xpose.msra.mxu0 0.0
        %302 = vmatpush.xpose.msra.mxu0 0.0
        %303 = vmatpush.xpose.msra.mxu0 0.0
        %304 = vmatpush.xpose.msra.mxu0 0.0
        %305 = vmatpush.xpose.msra.mxu0 0.0
        %306 = vmatpush.xpose.msra.mxu0 0.0
        %307 = vmatpush.xpose.msra.mxu0 %v291
        %308 = vmatpush.xpose.msra.mxu0 %v288
        %309 = vmatmul.f32.gmra.mxu0 %v288
        %v310 = vpop.f32.mrf.mxu0
        %v311 = vadd.f32 0.0, %v310
        %312 = vmatmul.f32.gmra.mxu0 %v291
        %v313 = vpop.f32.mrf.mxu0
        %v314 = vadd.f32 0.0, %v313
        %315 = vdwg.mxu0
        %v317 = vsel %vm224, %v254, 0
        %v320 = vsel %vm224, %v286, 0
        %322 = vmatpush.xpose.msra.mxu0 0.0
        %323 = vmatpush.xpose.msra.mxu0 0.0
        %324 = vmatpush.xpose.msra.mxu0 0.0
        %325 = vmatpush.xpose.msra.mxu0 0.0
        %326 = vmatpush.xpose.msra.mxu0 0.0
        %327 = vmatpush.xpose.msra.mxu0 0.0
        %328 = vmatpush.xpose.msra.mxu0 0.0
        %329 = vmatpush.xpose.msra.mxu0 0.0
        %330 = vmatpush.xpose.msra.mxu0 0.0
        %331 = vmatpush.xpose.msra.mxu0 0.0
        %332 = vmatpush.xpose.msra.mxu0 0.0
        %333 = vmatpush.xpose.msra.mxu0 0.0
        %334 = vmatpush.xpose.msra.mxu0 0.0
        %335 = vmatpush.xpose.msra.mxu0 0.0
        %336 = vmatpush.xpose.msra.mxu0 %v320
        %337 = vmatpush.xpose.msra.mxu0 %v317
        %338 = vmatmul.f32.gmra.mxu0 %v317
        %v339 = vpop.f32.mrf.mxu0
        %v340 = vadd.f32 0.0, %v339
        %341 = vmatmul.f32.gmra.mxu0 %v320
        %v342 = vpop.f32.mrf.mxu0
        %v343 = vadd.f32 0.0, %v342
        %344 = vdwg.mxu0
        %v345 = vsub.f32 %v311, 1.0
        %v346 = vsub.f32 %v314, 1.0
        %v347 = vsub.f32 %v340, 1.0
        %v348 = vsub.f32 %v343, 1.0
        %v349 = vmul.f32 %v345, 14.285714
        %v350 = vmul.f32 %v346, 14.285714
        %v351 = vmul.f32 %v347, 14.285714
        %v352 = vmul.f32 %v348, 14.285714
        %v353 = vmul.f32 %v349, 1.442695
        %v354 = vpow.pop %v353
        %v355 = vmul.f32 %v350, 1.442695
        %v356 = vpow.pop %v355
        %v357 = vmul.f32 %v351, 1.442695
        %v358 = vpow.pop %v357
        %v359 = vmul.f32 %v352, 1.442695
        %v360 = vpow.pop %v359
        %v361 = vmul.f32 %v253, %v285
        %v362 = vmul.f32 %v254, %v286
        %v363 = vsel %vm224, %v361, 0.0
        %364 = vadd.xlane.f32.xlu0 %v363
        %v365 = vpop.xlane.xlu0 %364
        %v366 = vsel %vm224, %v362, 0.0
        %367 = vadd.xlane.f32.xlu0 %v366
        %v368 = vpop.xlane.xlu0 %367
        %v369 = vsub.f32 %v365, 1.0
        %v370 = vsub.f32 %v368, 1.0
        %v371 = vmul.f32 %v369, 14.285714
        %v372 = vmul.f32 %v370, 14.285714
        %v373 = vmul.f32 %v371, 1.442695
        %v374 = vpow.pop %v373
        %v375 = vmul.f32 %v372, 1.442695
        %v376 = vpow.pop %v375
        %vm377 = vcmask 130048
        %v378 = vsel %vm377, %v354, 0.0
        %379 = vadd.xlane.f32.xlu0 %v378
        %v380 = vpop.xlane.xlu0 %379
        %v381 = vsel %vm377, %v356, 0.0
        %382 = vadd.xlane.f32.xlu0 %v381
        %v383 = vpop.xlane.xlu0 %382
        %v384 = vsel %vm377, %v358, 0.0
        %385 = vadd.xlane.f32.xlu0 %v384
        %v386 = vpop.xlane.xlu0 %385
        %v387 = vsel %vm377, %v360, 0.0
        %388 = vadd.xlane.f32.xlu0 %v387
        %v389 = vpop.xlane.xlu0 %388
        %v390 = vsub.f32 %v380, 1.0
        %v391 = vsub.f32 %v383, 1.0
        %v392 = vsub.f32 %v386, 1.0
        %v393 = vsub.f32 %v389, 1.0
        %v394 = vlaneseq
        %v395 = vshrl.u32 %v394, 7
        %v396 = vadd.s32 %v395, 8
        %v397 = vlaneseq
        %v398 = vand.u32 %v397, 127
        %vm399 = vcmp.ne.s32.totalorder %v398, %v395
        %vm400 = vcmp.ne.s32.totalorder %v398, %v396
        %v401 = vsub.s32 %v395, 8
        %vm402 = vcmp.ne.s32.totalorder %v398, %v401
        %vm403 = vmand %vm399, %vm402
        %vm404 = vmand %vm400, %vm399
        %v405 = vld [vmem:[%s216] sm:$0xff]
        %v406 = vld [vmem:[%s216 + $0x8] sm:$0xff]
        %v407 = vld [vmem:[%s216 + $0x10] sm:$0xff]
        %v408 = vld [vmem:[%s216 + $0x18] sm:$0xff]
        %vm409 = vcmask 64512
        %v410 = vsel %vm409, %v405, -inf
        %411 = vmax.xlane.f32.xlu0 %v410
        %v412 = vpop.xlane.xlu0 %411
        %v413 = vsel %vm409, %v406, -inf
        %414 = vmax.xlane.f32.xlu0 %v413
        %v415 = vpop.xlane.xlu0 %414
        %v416 = vsel %vm409, %v407, -inf
        %417 = vmax.xlane.f32.xlu0 %v416
        %v418 = vpop.xlane.xlu0 %417
        %v419 = vsel %vm409, %v408, -inf
        %420 = vmax.xlane.f32.xlu0 %v419
        %v421 = vpop.xlane.xlu0 %420
        %vm422 = vcmp.eq.f32.partialorder %v405, %v412
        %vm423 = vcmp.eq.f32.partialorder %v406, %v415
        %vm424 = vcmp.eq.f32.partialorder %v407, %v418
        %vm425 = vcmp.eq.f32.partialorder %v408, %v421
        %v426 = vsel %vm422, %v398, 8
        %v427 = vsel %vm423, %v398, 8
        %v428 = vsel %vm424, %v398, 8
        %v429 = vsel %vm425, %v398, 8
        %v430 = vsel %vm409, %v426, 2147483647
        %v431 = vand.u32 %v430, 65535
        %v432 = vshra.s32 %v430, 16
        %v433 = vcvt.s32.f32 %v431
        %v434 = vcvt.s32.f32 %v432
        %435 = vmin.xlane.f32.xlu0 %v434
        %v436 = vpop.xlane.xlu0 %435
        %vm437 = vcmp.eq.f32.partialorder %v434, %v436
        %v438 = vsel %vm437, %v433, inf
        %439 = vmin.xlane.f32.xlu0 %v438
        %v440 = vpop.xlane.xlu0 %439
        %v441 = vcvt.f32.s32 %v440
        %v442 = vcvt.f32.s32 %v436
        %v443 = vshll.u32 %v442, 16
        %v444 = vadd.s32 %v443, %v441
        %v445 = vsel %vm409, %v427, 2147483647
        %v446 = vand.u32 %v445, 65535
        %v447 = vshra.s32 %v445, 16
        %v448 = vcvt.s32.f32 %v446
        %v449 = vcvt.s32.f32 %v447
        %450 = vmin.xlane.f32.xlu0 %v449
        %v451 = vpop.xlane.xlu0 %450
        %vm452 = vcmp.eq.f32.partialorder %v449, %v451
        %v453 = vsel %vm452, %v448, inf
        %454 = vmin.xlane.f32.xlu0 %v453
        %v455 = vpop.xlane.xlu0 %454
        %v456 = vcvt.f32.s32 %v455
        %v457 = vcvt.f32.s32 %v451
        %v458 = vshll.u32 %v457, 16
        %v459 = vadd.s32 %v458, %v456
        %v460 = vsel %vm409, %v428, 2147483647
        %v461 = vand.u32 %v460, 65535
        %v462 = vshra.s32 %v460, 16
        %v463 = vcvt.s32.f32 %v461
        %v464 = vcvt.s32.f32 %v462
        %465 = vmin.xlane.f32.xlu0 %v464
        %v466 = vpop.xlane.xlu0 %465
        %vm467 = vcmp.eq.f32.partialorder %v464, %v466
        %v468 = vsel %vm467, %v463, inf
        %469 = vmin.xlane.f32.xlu0 %v468
        %v470 = vpop.xlane.xlu0 %469
        %v471 = vcvt.f32.s32 %v470
        %v472 = vcvt.f32.s32 %v466
        %v473 = vshll.u32 %v472, 16
        %v474 = vadd.s32 %v473, %v471
        %v475 = vsel %vm409, %v429, 2147483647
        %v476 = vand.u32 %v475, 65535
        %v477 = vshra.s32 %v475, 16
        %v478 = vcvt.s32.f32 %v476
        %v479 = vcvt.s32.f32 %v477
        %480 = vmin.xlane.f32.xlu0 %v479
        %v481 = vpop.xlane.xlu0 %480
        %vm482 = vcmp.eq.f32.partialorder %v479, %v481
        %v483 = vsel %vm482, %v478, inf
        %484 = vmin.xlane.f32.xlu0 %v483
        %v485 = vpop.xlane.xlu0 %484
        %v486 = vcvt.f32.s32 %v485
        %v487 = vcvt.f32.s32 %v481
        %v488 = vshll.u32 %v487, 16
        %v489 = vadd.s32 %v488, %v486
        %vm490 = vcmp.eq.s32.totalorder %v398, %v444
        %vm491 = vcmp.eq.s32.totalorder %v398, %v459
        %vm492 = vcmp.eq.s32.totalorder %v398, %v474
        %vm493 = vcmp.eq.s32.totalorder %v398, %v489
        %v494 = vsel %vm490, -inf, %v405
        %v495 = vsel %vm491, -inf, %v406
        %v496 = vsel %vm492, -inf, %v407
        %v497 = vsel %vm493, -inf, %v408
        %v498 = vsel %vm409, %v494, -inf
        %499 = vmax.xlane.f32.xlu0 %v498
        %v500 = vpop.xlane.xlu0 %499
        %v501 = vsel %vm409, %v495, -inf
        %502 = vmax.xlane.f32.xlu0 %v501
        %v503 = vpop.xlane.xlu0 %502
        %v504 = vsel %vm409, %v496, -inf
        %505 = vmax.xlane.f32.xlu0 %v504
        %v506 = vpop.xlane.xlu0 %505
        %v507 = vsel %vm409, %v497, -inf
        %508 = vmax.xlane.f32.xlu0 %v507
        %v509 = vpop.xlane.xlu0 %508
        %vm510 = vcmp.eq.f32.partialorder %v494, %v500
        %vm511 = vcmp.eq.f32.partialorder %v495, %v503
        %vm512 = vcmp.eq.f32.partialorder %v496, %v506
        %vm513 = vcmp.eq.f32.partialorder %v497, %v509
        %v514 = vsel %vm510, %v398, 8
        %v515 = vsel %vm511, %v398, 8
        %v516 = vsel %vm512, %v398, 8
        %v517 = vsel %vm513, %v398, 8
        %v518 = vsel %vm409, %v514, 2147483647
        %v519 = vand.u32 %v518, 65535
        %v520 = vshra.s32 %v518, 16
        %v521 = vcvt.s32.f32 %v519
        %v522 = vcvt.s32.f32 %v520
        %523 = vmin.xlane.f32.xlu0 %v522
        %v524 = vpop.xlane.xlu0 %523
        %vm525 = vcmp.eq.f32.partialorder %v522, %v524
        %v526 = vsel %vm525, %v521, inf
        %527 = vmin.xlane.f32.xlu0 %v526
        %v528 = vpop.xlane.xlu0 %527
        %v529 = vcvt.f32.s32 %v528
        %v530 = vcvt.f32.s32 %v524
        %v531 = vshll.u32 %v530, 16
        %v532 = vadd.s32 %v531, %v529
        %v533 = vsel %vm409, %v515, 2147483647
        %v534 = vand.u32 %v533, 65535
        %v535 = vshra.s32 %v533, 16
        %v536 = vcvt.s32.f32 %v534
        %v537 = vcvt.s32.f32 %v535
        %538 = vmin.xlane.f32.xlu0 %v537
        %v539 = vpop.xlane.xlu0 %538
        %vm540 = vcmp.eq.f32.partialorder %v537, %v539
        %v541 = vsel %vm540, %v536, inf
        %542 = vmin.xlane.f32.xlu0 %v541
        %v543 = vpop.xlane.xlu0 %542
        %v544 = vcvt.f32.s32 %v543
        %v545 = vcvt.f32.s32 %v539
        %v546 = vshll.u32 %v545, 16
        %v547 = vadd.s32 %v546, %v544
        %v548 = vsel %vm409, %v516, 2147483647
        %v549 = vand.u32 %v548, 65535
        %v550 = vshra.s32 %v548, 16
        %v551 = vcvt.s32.f32 %v549
        %v552 = vcvt.s32.f32 %v550
        %553 = vmin.xlane.f32.xlu0 %v552
        %v554 = vpop.xlane.xlu0 %553
        %vm555 = vcmp.eq.f32.partialorder %v552, %v554
        %v556 = vsel %vm555, %v551, inf
        %557 = vmin.xlane.f32.xlu0 %v556
        %v558 = vpop.xlane.xlu0 %557
        %v559 = vcvt.f32.s32 %v558
        %v560 = vcvt.f32.s32 %v554
        %v561 = vshll.u32 %v560, 16
        %v562 = vadd.s32 %v561, %v559
        %v563 = vsel %vm409, %v517, 2147483647
        %v564 = vand.u32 %v563, 65535
        %v565 = vshra.s32 %v563, 16
        %v566 = vcvt.s32.f32 %v564
        %v567 = vcvt.s32.f32 %v565
        %568 = vmin.xlane.f32.xlu0 %v567
        %v569 = vpop.xlane.xlu0 %568
        %vm570 = vcmp.eq.f32.partialorder %v567, %v569
        %v571 = vsel %vm570, %v566, inf
        %572 = vmin.xlane.f32.xlu0 %v571
        %v573 = vpop.xlane.xlu0 %572
        %v574 = vcvt.f32.s32 %v573
        %v575 = vcvt.f32.s32 %v569
        %v576 = vshll.u32 %v575, 16
        %v577 = vadd.s32 %v576, %v574
        %vm578 = vcmp.eq.s32.totalorder %v398, %v532
        %vm579 = vcmp.eq.s32.totalorder %v398, %v547
        %vm580 = vcmp.eq.s32.totalorder %v398, %v562
        %vm581 = vcmp.eq.s32.totalorder %v398, %v577
        %vm582 = vmor %vm490, %vm578
        %vm583 = vmor %vm491, %vm579
        %vm584 = vmor %vm492, %vm580
        %vm585 = vmor %vm493, %vm581
        %v586 = vsel %vm578, -inf, %v494
        %v587 = vsel %vm579, -inf, %v495
        %v588 = vsel %vm580, -inf, %v496
        %v589 = vsel %vm581, -inf, %v497
        %v590 = vsel %vm409, %v586, -inf
        %591 = vmax.xlane.f32.xlu0 %v590
        %v592 = vpop.xlane.xlu0 %591
        %v593 = vsel %vm409, %v587, -inf
        %594 = vmax.xlane.f32.xlu0 %v593
        %v595 = vpop.xlane.xlu0 %594
        %v596 = vsel %vm409, %v588, -inf
        %597 = vmax.xlane.f32.xlu0 %v596
        %v598 = vpop.xlane.xlu0 %597
        %v599 = vsel %vm409, %v589, -inf
        %600 = vmax.xlane.f32.xlu0 %v599
        %v601 = vpop.xlane.xlu0 %600
        %vm602 = vcmp.eq.f32.partialorder %v586, %v592
        %vm603 = vcmp.eq.f32.partialorder %v587, %v595
        %vm604 = vcmp.eq.f32.partialorder %v588, %v598
        %vm605 = vcmp.eq.f32.partialorder %v589, %v601
        %v606 = vsel %vm602, %v398, 8
        %v607 = vsel %vm603, %v398, 8
        %v608 = vsel %vm604, %v398, 8
        %v609 = vsel %vm605, %v398, 8
        %v610 = vsel %vm409, %v606, 2147483647
        %v611 = vand.u32 %v610, 65535
        %v612 = vshra.s32 %v610, 16
        %v613 = vcvt.s32.f32 %v611
        %v614 = vcvt.s32.f32 %v612
        %615 = vmin.xlane.f32.xlu0 %v614
        %v616 = vpop.xlane.xlu0 %615
        %vm617 = vcmp.eq.f32.partialorder %v614, %v616
        %v618 = vsel %vm617, %v613, inf
        %619 = vmin.xlane.f32.xlu0 %v618
        %v620 = vpop.xlane.xlu0 %619
        %v621 = vcvt.f32.s32 %v620
        %v622 = vcvt.f32.s32 %v616
        %v623 = vshll.u32 %v622, 16
        %v624 = vadd.s32 %v623, %v621
        %v625 = vsel %vm409, %v607, 2147483647
        %v626 = vand.u32 %v625, 65535
        %v627 = vshra.s32 %v625, 16
        %v628 = vcvt.s32.f32 %v626
        %v629 = vcvt.s32.f32 %v627
        %630 = vmin.xlane.f32.xlu0 %v629
        %v631 = vpop.xlane.xlu0 %630
        %vm632 = vcmp.eq.f32.partialorder %v629, %v631
        %v633 = vsel %vm632, %v628, inf
        %634 = vmin.xlane.f32.xlu0 %v633
        %v635 = vpop.xlane.xlu0 %634
        %v636 = vcvt.f32.s32 %v635
        %v637 = vcvt.f32.s32 %v631
        %v638 = vshll.u32 %v637, 16
        %v639 = vadd.s32 %v638, %v636
        %v640 = vsel %vm409, %v608, 2147483647
        %v641 = vand.u32 %v640, 65535
        %v642 = vshra.s32 %v640, 16
        %v643 = vcvt.s32.f32 %v641
        %v644 = vcvt.s32.f32 %v642
        %645 = vmin.xlane.f32.xlu0 %v644
        %v646 = vpop.xlane.xlu0 %645
        %vm647 = vcmp.eq.f32.partialorder %v644, %v646
        %v648 = vsel %vm647, %v643, inf
        %649 = vmin.xlane.f32.xlu0 %v648
        %v650 = vpop.xlane.xlu0 %649
        %v651 = vcvt.f32.s32 %v650
        %v652 = vcvt.f32.s32 %v646
        %v653 = vshll.u32 %v652, 16
        %v654 = vadd.s32 %v653, %v651
        %v655 = vsel %vm409, %v609, 2147483647
        %v656 = vand.u32 %v655, 65535
        %v657 = vshra.s32 %v655, 16
        %v658 = vcvt.s32.f32 %v656
        %v659 = vcvt.s32.f32 %v657
        %660 = vmin.xlane.f32.xlu0 %v659
        %v661 = vpop.xlane.xlu0 %660
        %vm662 = vcmp.eq.f32.partialorder %v659, %v661
        %v663 = vsel %vm662, %v658, inf
        %664 = vmin.xlane.f32.xlu0 %v663
        %v665 = vpop.xlane.xlu0 %664
        %v666 = vcvt.f32.s32 %v665
        %v667 = vcvt.f32.s32 %v661
        %v668 = vshll.u32 %v667, 16
        %v669 = vadd.s32 %v668, %v666
        %vm670 = vcmp.eq.s32.totalorder %v398, %v624
        %vm671 = vcmp.eq.s32.totalorder %v398, %v639
        %vm672 = vcmp.eq.s32.totalorder %v398, %v654
        %vm673 = vcmp.eq.s32.totalorder %v398, %v669
        %vm674 = vmor %vm582, %vm670
        %vm675 = vmor %vm583, %vm671
        %vm676 = vmor %vm584, %vm672
        %vm677 = vmor %vm585, %vm673
        %v678 = vsel %vm403, 1, 0
        %v679 = vsel %vm404, 1, 0
        %vm680 = vcmp.eq.s32.totalorder %v678, 1
        %vm681 = vcmp.eq.s32.totalorder %v679, 1
        %vm682 = vmand %vm674, %vm680
        %vm683 = vmand %vm675, %vm681
        %vm684 = vmand %vm676, %vm680
        %vm685 = vmand %vm677, %vm681
        %v686 = vsel %vm682, %v405, 0.0
        %v687 = vsel %vm683, %v406, 0.0
        %v688 = vsel %vm684, %v407, 0.0
        %v689 = vsel %vm685, %v408, 0.0
        %692 = vrot.lane.b32.xlu0 %v354, 120
        %v693 = vpop.permute.xlu0 %692
        %694 = vrot.lane.b32.xlu0 %v358, 120
        %v695 = vpop.permute.xlu0 %694
        %v698 = vmul.f32 %v686, %v693
        %v699 = vmul.f32 %v688, %v695
        %v700 = vsel %vm409, %v698, 0.0
        %701 = vadd.xlane.f32.xlu0 %v700
        %v702 = vpop.xlane.xlu0 %701
        %v703 = vsel %vm409, %v699, 0.0
        %704 = vadd.xlane.f32.xlu0 %v703
        %v705 = vpop.xlane.xlu0 %704
        %v706 = vadd.f32 %v374, %v702
        %v707 = vadd.f32 %v376, %v705
        %v708 = vmul.f32 %v687, %v356
        %v709 = vmul.f32 %v689, %v360
        %v710 = vsel %vm409, %v708, 0.0
        %711 = vadd.xlane.f32.xlu0 %v710
        %v712 = vpop.xlane.xlu0 %711
        %v713 = vsel %vm409, %v709, 0.0
        %714 = vadd.xlane.f32.xlu0 %v713
        %v715 = vpop.xlane.xlu0 %714
        %v716 = vadd.f32 %v374, %v712
        %v717 = vadd.f32 %v376, %v715
        %v720 = vperm.slane %v706, %v398
        %v721 = vperm.slane %v707, %v398
        %vm722 = vcmask 1041409
        %v723 = vsel %vm722, %v721, %v720
        %v727 = vadd.s32 %v398, 4294967288
        %v728 = vperm.slane %v716, %v727
        %v729 = vperm.slane %v717, %v727
        %v730 = vsel %vm722, %v729, %v728
        %v732 = vsel %vm409, %v723, %v730
        %v733 = vadd.f32 %v390, 1e-09
        %v734 = vadd.f32 %v391, 1e-09
        %v735 = vadd.f32 %v392, 1e-09
        %v736 = vadd.f32 %v393, 1e-09
        %v737 = vrcp.pop %v733
        %v738 = vrcp.pop %v734
        %v739 = vrcp.pop %v735
        %v740 = vrcp.pop %v736
        %v745 = vperm.slane %v737, %v398
        %v746 = vperm.slane %v738, %v727
        %vm747 = vcmask 130112
        %v748 = vsel %vm747, %v746, %v745
        %v749 = vperm.slane %v739, %v398
        %v750 = vperm.slane %v740, %v727
        %v751 = vsel %vm747, %v750, %v749
        %v752 = vsel %vm722, %v751, %v748
        %v754 = vmul.f32 %v732, %v752
        %v755 = vadd.f32 %v754, 1e-09
        %v756 = vlog2.pop %v755
        %v757 = vmul.f32 %v756, 0.6931472
        %v758 = vsub.f32 0.0, %v757
        %vm759 = vcmask 123904
        %760 = vst.msk [vmem:[%s198] sm:$0x3] %vm759, %v758
        %s761 = sand.u32 %s103, 1
        %s762 = scalar_lea.sflag [#allocation3], %s761
        %s763 = sand.u32 %s103, 1
        %s764 = smul.addr %s763, 2
        %s765 = scalar_lea.vmem [#allocation2], %s764
        // Predicated region
        $region33: #{tpu_custom_call.1} parent=31 // pred_check
          %p766 = pneg %p113
        $region34: #{tpu_custom_call.1} parent=31 // pred_check_branch
          %768 = sbr.rel (%p766) target = $region36
        $region35: #{tpu_custom_call.1} parent=31 // pred_region
          %770 = vsyncadd %s762, 0
          %s771 = smul.addr %s17, 2
          %s772 = scalar_lea.hbm %s3, %s771
          %s774 = sshll.u32 %s765, 4
          %s775 = int_to_ptr.vmem [resolvable:$true] %s774
          %s776 = sshll.u32 %s772, 4
          %s777 = int_to_ptr.hbm [resolvable:$true] %s776
          %779 = dma.vmem_to_hbm [thread:$0]  %s775, 32, %s777, %s762
        $region36: #{tpu_custom_call.1} parent=31 // pred_fallthru
          _
      $region32: #{tpu_custom_call.1} parent=5 // pred_fallthru
        _
      %p780 = scmp.le.s32.totalorder 2, %s12
      // Predicated region
      $region37: #{tpu_custom_call.1} parent=5 // pred_check
        %p781 = pneg %p780
      $region38: #{tpu_custom_call.1} parent=5 // pred_check_branch
        %783 = sbr.rel (%p781) target = $region40
      $region39: #{tpu_custom_call.1} parent=5 // pred_region
        %s784 = ssub.s32 %s12, 2
        // Predicated region
        $region41: #{tpu_custom_call.1} parent=39 // pred_check
          %p785 = pneg %p119
        $region42: #{tpu_custom_call.1} parent=39 // pred_check_branch
          %787 = sbr.rel (%p785) target = $region44
        $region43: #{tpu_custom_call.1} parent=39 // pred_region
          %s788 = sand.u32 %s104, 1
          %s789 = scalar_lea.sflag [#allocation3], %s788
          %s790 = sand.u32 %s104, 1
          %s791 = smul.addr %s790, 2
          %s792 = scalar_lea.vmem [#allocation2], %s791
          %794 = dma.done %s789, 32
        $region44: #{tpu_custom_call.1} parent=39 // pred_fallthru
          _
      $region40: #{tpu_custom_call.1} parent=5 // pred_fallthru
        _
    $region6: #{tpu_custom_call.1} parent=1 // loop_footer
      %s16 = sadd.s32 1, %s12
    $region7: #{tpu_custom_call.1} parent=1 // loop_footer_branch
      %11 = sbr.rel target = $region3
    $region8: #{tpu_custom_call.1} parent=1 // loop_exit
      _
    %795 = vsyncpa [#allocation3], 1
    %s796 = scalar_lea.sflag [#allocation3], 1
    %797 = vsyncpa %s796, 1

</llo_original>
